<compile_context>
chip_gen: v7x
topology: tpu7x:2x2x1
jax: 0.10.0
libtpu: 0.0.40
codegen_flags: <defaults>
</compile_context>

<pallas_src>
import functools
import numpy as np
import jax
import jax.numpy as jnp
from jax.experimental import pallas as pl
from jax.experimental.pallas import tpu as pltpu

IMAGE_ENCODER_INPUT_SIZE = 32   # small stand-in for the production 512
PATCH = 8
EMBED_DIM = 128                 # multiple of 128 -> lane-dense encoder output


# ----------------------------------------------------------------------------
# Host-side glue: PyTorch-equivalent bilinear (align_corners=False) matrices.
# ----------------------------------------------------------------------------
def _bilinear_weight_matrix(out_size: int, in_size: int) -> np.ndarray:
    w = np.zeros((out_size, in_size), dtype=np.float32)
    scale = in_size / out_size
    for i in range(out_size):
        src = max((i + 0.5) * scale - 0.5, 0.0)
        i0 = min(int(np.floor(src)), in_size - 1)
        i1 = min(i0 + 1, in_size - 1)
        frac = src - i0
        w[i, i0] += 1.0 - frac
        w[i, i1] += frac
    return w


def get_preprocess_shape(original_size, long_side_length):
    h, w = float(original_size[0]), float(original_size[1])
    scale = long_side_length / max(h, w)
    return int(np.floor(scale * h + 0.5)), int(np.floor(scale * w + 0.5))


def _full_spec(shape):
    nd = len(shape)
    return pl.BlockSpec(shape, lambda *_, nd=nd: (0,) * nd)


# ----------------------------------------------------------------------------
# Pallas kernel 1: fused resize + min/max scale + zero pad.
#   - channels folded into the M dimension (rows) of both matmuls
#   - column resize + column zero-pad absorbed into wcol (W, S)
#   - row resize + row zero-pad absorbed into a block-diagonal wrow (3S, 3H)
#   - single full-tile store of the (3*S, S) scaled, padded image
# ----------------------------------------------------------------------------
def _make_preprocess_kernel(S, new_h, new_w, scale_image):
    def kernel(x_ref, wrow_ref, wcol_ref, out_ref):
        # x_ref    : (3*H, W)   bf16  channel-stacked rows (row = c*H + h)
        # wrow_ref : (3*S, 3*H) bf16  block-diag row-resize, zero rows >= new_h
        # wcol_ref : (W, S)     bf16  column-resize, zero cols >= new_w
        # out_ref  : (3*S, S)   f32   scaled + zero-padded image (CHW stacked on rows)
        t = jnp.dot(x_ref[...], wcol_ref[...],
                    preferred_element_type=jnp.float32).astype(jnp.bfloat16)   # (3H, S)
        m = jnp.dot(wrow_ref[...], t, preferred_element_type=jnp.float32)      # (3S, S)

        if scale_image:
            # min/max over the *valid* (resized, un-padded) region only.
            rows = jax.lax.broadcasted_iota(jnp.int32, m.shape, 0)
            cols = jax.lax.broadcasted_iota(jnp.int32, m.shape, 1)
            row_ok = rows < new_h
            for c in (1, 2):
                row_ok = jnp.logical_or(
                    row_ok,
                    jnp.logical_and(rows >= c * S, rows < c * S + new_h))
            valid = jnp.logical_and(row_ok, cols < new_w)

            min_val = jnp.min(jnp.where(valid, m, jnp.inf), keepdims=True)    # (1, 1)
            max_val = jnp.max(jnp.where(valid, m, -jnp.inf), keepdims=True)   # (1, 1)
            denom = jnp.maximum(max_val - min_val, 1e-8)        # torch.clip(..., min=1e-8)
            inv = pl.reciprocal(denom, approx=True)             # EUP slot, ~free
            m = jnp.where(valid, (m - min_val) * inv, 0.0)      # pad region stays exactly 0
        out_ref[...] = m                                        # single full store
    return kernel


def preprocess_pallas(x_rows, wrow_block, wcol_pad, S, new_h, new_w, scale_image):
    kernel = _make_preprocess_kernel(S, new_h, new_w, scale_image)
    # TODO(synk): for production S (>=512) on v7x, tile the grid over output row
    # blocks and set pltpu.CompilerParams(vmem_limit_bytes=...) instead of one block.
    return pl.pallas_call(
        kernel,
        out_shape=jax.ShapeDtypeStruct((3 * S, S), jnp.float32),
        grid=(1,),
        in_specs=[_full_spec(x_rows.shape),
                  _full_spec(wrow_block.shape),
                  _full_spec(wcol_pad.shape)],
        out_specs=_full_spec((3 * S, S)),
    )(x_rows, wrow_block, wcol_pad)


# ----------------------------------------------------------------------------
# Pallas kernel 2: synthetic image_encoder = patch-embed matmul + GELU + linear,
# tiled over patch rows with a "parallel" grid axis, bf16 MXU, f32 accumulation.
# ----------------------------------------------------------------------------
def _encoder_kernel(x_ref, w1_ref, b1_ref, w2_ref, b2_ref, out_ref):
    # x_ref : (TM, pdim) f32 ; w1: (pdim, D) bf16 ; b1: (1, D) f32
    # w2    : (D, D)    bf16 ; b2: (1, D)  f32   ; out: (TM, D) f32
    x = x_ref[...].astype(jnp.bfloat16)
    h = jnp.dot(x, w1_ref[...], preferred_element_type=jnp.float32) + b1_ref[...]
    # TODO(synk): PyTorch nn.GELU defaults to exact erf; tanh-approx GELU is used
    # here (erf has no Mosaic lowering) -> ~1e-3 relative difference.
    h = jax.nn.gelu(h, approximate=True).astype(jnp.bfloat16)
    out_ref[...] = (jnp.dot(h, w2_ref[...], preferred_element_type=jnp.float32)
                    + b2_ref[...])


def encoder_pallas(patches, w1, b1, w2, b2, tile_m=8):
    Np, pdim = patches.shape
    D = w1.shape[1]
    tm = tile_m if Np % tile_m == 0 else Np
    return pl.pallas_call(
        _encoder_kernel,
        out_shape=jax.ShapeDtypeStruct((Np, D), jnp.float32),
        grid=(Np // tm,),
        in_specs=[pl.BlockSpec((tm, pdim), lambda i: (i, 0)),
                  pl.BlockSpec((pdim, D), lambda i: (0, 0)),
                  pl.BlockSpec((1, D), lambda i: (0, 0)),
                  pl.BlockSpec((D, D), lambda i: (0, 0)),
                  pl.BlockSpec((1, D), lambda i: (0, 0))],
        out_specs=pl.BlockSpec((tm, D), lambda i: (i, 0)),
        compiler_params=pltpu.CompilerParams(
            dimension_semantics=("parallel",)),
    )(patches, w1, b1, w2, b2)


# ----------------------------------------------------------------------------
# Shared epilogue: patchify + synthetic encoder + NCHW presentation.
# ----------------------------------------------------------------------------
def _encode(padded_chw, w1, b1, w2, b2, S):
    # Patchify glue (tiny XLA reshape/transpose; 5-D transposes do not lower in Mosaic).
    npp = S // PATCH
    patches = padded_chw.reshape(3, npp, PATCH, npp, PATCH)
    patches = jnp.transpose(patches, (1, 3, 0, 2, 4)).reshape(
        npp * npp, 3 * PATCH * PATCH).astype(jnp.float32)              # (Np, 192)
    emb = encoder_pallas(patches, w1, b1, w2, b2)                      # (Np, D)
    # present encoder output NCHW-style: (1, D, npp, npp)
    return jnp.transpose(emb.reshape(npp, npp, EMBED_DIM), (2, 0, 1))[None]


# ----------------------------------------------------------------------------
# Full forward, mirroring EncoderOnnxModel.forward
# ----------------------------------------------------------------------------
def encoder_onnx_forward(image_hwc, original_size, params,
                         preprocess_image=True, scale_image=True,
                         image_encoder_input_size=IMAGE_ENCODER_INPUT_SIZE):
    S = image_encoder_input_size
    w1, b1, w2, b2 = params["w1"], params["b1"], params["w2"], params["b2"]

    if not preprocess_image:
        # Feedback: check the shape instead of silently assuming S.
        assert image_hwc.shape == (S, S, 3), image_hwc.shape

        @jax.jit
        def run_plain(img, w1, b1, w2, b2):
            padded = jnp.transpose(img, (2, 0, 1)).astype(jnp.float32)
            return _encode(padded, w1, b1, w2, b2, S)
        return run_plain(image_hwc, w1, b1, w2, b2)

    H, W, C = image_hwc.shape
    assert C == 3, image_hwc.shape
    # original_size must be static: the interpolate output shape depends on it.
    new_h, new_w = get_preprocess_shape(original_size, S)

    # Column resize + zero padding to S absorbed into one (W, S) matrix.
    wcol = np.zeros((W, S), np.float32)
    wcol[:, :new_w] = _bilinear_weight_matrix(new_w, W).T
    # Row resize: zero-padded to S rows, block-diagonal over the 3 channels so a
    # single matmul handles all channels (one dense MXU push instead of 3 skinny ones).
    wh = _bilinear_weight_matrix(new_h, H)
    wrow = np.zeros((3 * S, 3 * H), np.float32)
    for c in range(3):
        wrow[c * S:c * S + new_h, c * H:(c + 1) * H] = wh

    wrow = jnp.asarray(wrow, jnp.bfloat16)
    wcol = jnp.asarray(wcol, jnp.bfloat16)

    @jax.jit
    def run(img, wrow, wcol, w1, b1, w2, b2):
        # torch: image.permute(2,0,1).unsqueeze(0) -> here CHW stacked on rows, bf16.
        x_rows = jnp.transpose(img, (2, 0, 1)).reshape(3 * H, W).astype(jnp.bfloat16)
        padded = preprocess_pallas(
            x_rows, wrow, wcol, S, new_h, new_w, scale_image).reshape(3, S, S)
        # TODO(synk): normalize_image path (F2.normalize helper) is not defined in the
        # source module; the default normalize_image=False is what is reproduced.
        return _encode(padded, w1, b1, w2, b2, S)

    return run(image_hwc, wrow, wcol, w1, b1, w2, b2)


if __name__ == "__main__":
    key = jax.random.PRNGKey(0)
    k_img, k_w1, k_b1, k_w2, k_b2 = jax.random.split(key, 5)

    H, W = 24, 20
    image = jax.random.uniform(k_img, (H, W, 3), jnp.float32, 0.0, 255.0)
    original_size = (H, W)

    pdim = 3 * PATCH * PATCH
    params = {
        "w1": (jax.random.normal(k_w1, (pdim, EMBED_DIM), jnp.float32) * 0.02
               ).astype(jnp.bfloat16),
        "b1": jax.random.normal(k_b1, (1, EMBED_DIM), jnp.float32) * 0.02,
        "w2": (jax.random.normal(k_w2, (EMBED_DIM, EMBED_DIM), jnp.float32) * 0.02
               ).astype(jnp.bfloat16),
        "b2": jax.random.normal(k_b2, (1, EMBED_DIM), jnp.float32) * 0.02,
    }

    out = encoder_onnx_forward(image, original_size, params)
    out = jax.block_until_ready(out)
    expected = (1, EMBED_DIM, IMAGE_ENCODER_INPUT_SIZE // PATCH,
                IMAGE_ENCODER_INPUT_SIZE // PATCH)
    assert out.shape == expected, (out.shape, expected)
    assert bool(jnp.all(jnp.isfinite(out)))
    print("KERNEL_OK")
</pallas_src>

<mosaic_0001>
module attributes {stable_mosaic.version = 11 : i64} {
  func.func @kernel(%arg0: i32, %arg1: memref<72x20xbf16, #tpu.memory_space<vmem>>, %arg2: memref<96x72xbf16, #tpu.memory_space<vmem>>, %arg3: memref<20x32xbf16, #tpu.memory_space<vmem>>, %arg4: memref<96x32xf32, #tpu.memory_space<vmem>>) attributes {dimension_semantics = [#tpu.dimension_semantics<arbitrary>], iteration_bounds = array<i64: 1>, scalar_prefetch = 0 : i64, scratch_operands = 0 : i64, tpu.core_type = #tpu.core_type<tc>, window_params = [{pipeline_mode = #tpu.pipeline_mode<synchronous>, transform_indices = @transform_0, window_bounds = array<i64: 72, 20>}, {pipeline_mode = #tpu.pipeline_mode<synchronous>, transform_indices = @transform_1, window_bounds = array<i64: 96, 72>}, {pipeline_mode = #tpu.pipeline_mode<synchronous>, transform_indices = @transform_2, window_bounds = array<i64: 20, 32>}, {pipeline_mode = #tpu.pipeline_mode<synchronous>, transform_indices = @transform_3, window_bounds = array<i64: 96, 32>}]} {
    %c0 = arith.constant 0 : index
    %c0_0 = arith.constant 0 : index
    %0 = vector.load %arg1[%c0, %c0_0] : memref<72x20xbf16, #tpu.memory_space<vmem>>, vector<72x20xbf16>
    %c0_1 = arith.constant 0 : index
    %c0_2 = arith.constant 0 : index
    %1 = vector.load %arg3[%c0_1, %c0_2] : memref<20x32xbf16, #tpu.memory_space<vmem>>, vector<20x32xbf16>
    %cst = arith.constant dense<0.000000e+00> : vector<72x32xf32>
    %2 = tpu.matmul %0, %1, %cst {dimension_numbers = #tpu.dot_dimension_numbers<[1], [0], [0], [1], [0, 0, 1, 1], [], []>} : vector<72x20xbf16>, vector<20x32xbf16>, vector<72x32xf32> -> vector<72x32xf32>
    %3 = arith.truncf %2 : vector<72x32xf32> to vector<72x32xbf16>
    %c0_3 = arith.constant 0 : index
    %c0_4 = arith.constant 0 : index
    %4 = vector.load %arg2[%c0_3, %c0_4] : memref<96x72xbf16, #tpu.memory_space<vmem>>, vector<96x72xbf16>
    %cst_5 = arith.constant dense<0.000000e+00> : vector<96x32xf32>
    %5 = tpu.matmul %4, %3, %cst_5 {dimension_numbers = #tpu.dot_dimension_numbers<[1], [0], [0], [1], [0, 0, 1, 1], [], []>} : vector<96x72xbf16>, vector<72x32xbf16>, vector<96x32xf32> -> vector<96x32xf32>
    %6 = tpu.iota {dimensions = array<i32: 0>} : vector<96x32xi32>
    %7 = tpu.iota {dimensions = array<i32: 1>} : vector<96x32xi32>
    %c32_i32 = arith.constant 32 : i32
    %8 = vector.broadcast %c32_i32 : i32 to vector<96x32xi32>
    %9 = arith.cmpi slt, %6, %8 : vector<96x32xi32>
    %c32_i32_6 = arith.constant 32 : i32
    %10 = vector.broadcast %c32_i32_6 : i32 to vector<96x32xi32>
    %11 = arith.cmpi sge, %6, %10 : vector<96x32xi32>
    %c64_i32 = arith.constant 64 : i32
    %12 = vector.broadcast %c64_i32 : i32 to vector<96x32xi32>
    %13 = arith.cmpi slt, %6, %12 : vector<96x32xi32>
    %14 = arith.andi %11, %13 : vector<96x32xi1>
    %15 = arith.ori %9, %14 : vector<96x32xi1>
    %c64_i32_7 = arith.constant 64 : i32
    %16 = vector.broadcast %c64_i32_7 : i32 to vector<96x32xi32>
    %17 = arith.cmpi sge, %6, %16 : vector<96x32xi32>
    %c96_i32 = arith.constant 96 : i32
    %18 = vector.broadcast %c96_i32 : i32 to vector<96x32xi32>
    %19 = arith.cmpi slt, %6, %18 : vector<96x32xi32>
    %20 = arith.andi %17, %19 : vector<96x32xi1>
    %21 = arith.ori %15, %20 : vector<96x32xi1>
    %c27_i32 = arith.constant 27 : i32
    %22 = vector.broadcast %c27_i32 : i32 to vector<96x32xi32>
    %23 = arith.cmpi slt, %7, %22 : vector<96x32xi32>
    %24 = arith.andi %21, %23 : vector<96x32xi1>
    %cst_8 = arith.constant 0x7F800000 : f32
    %25 = vector.broadcast %cst_8 : f32 to vector<96x32xf32>
    %26 = arith.select %24, %5, %25 : vector<96x32xi1>, vector<96x32xf32>
    %27 = vector.shape_cast %26 : vector<96x32xf32> to vector<1x96x32xf32>
    %cst_9 = arith.constant dense<0x7F800000> : vector<1xf32>
    %28 = vector.multi_reduction <minimumf>, %27, %cst_9 [1, 2] : vector<1x96x32xf32> to vector<1xf32>
    %29 = vector.shape_cast %28 : vector<1xf32> to vector<1x1x1xf32>
    %30 = vector.extract %29[0, 0, 0] : f32 from vector<1x1x1xf32>
    %31 = vector.broadcast %30 : f32 to vector<1x1xf32>
    %cst_10 = arith.constant 0xFF800000 : f32
    %32 = vector.broadcast %cst_10 : f32 to vector<96x32xf32>
    %33 = arith.select %24, %5, %32 : vector<96x32xi1>, vector<96x32xf32>
    %34 = vector.shape_cast %33 : vector<96x32xf32> to vector<1x96x32xf32>
    %cst_11 = arith.constant dense<0xFF800000> : vector<1xf32>
    %35 = vector.multi_reduction <maximumf>, %34, %cst_11 [1, 2] : vector<1x96x32xf32> to vector<1xf32>
    %36 = vector.shape_cast %35 : vector<1xf32> to vector<1x1x1xf32>
    %37 = vector.extract %36[0, 0, 0] : f32 from vector<1x1x1xf32>
    %38 = vector.broadcast %37 : f32 to vector<1x1xf32>
    %39 = arith.subf %38, %31 : vector<1x1xf32>
    %cst_12 = arith.constant 9.99999993E-9 : f32
    %40 = vector.broadcast %cst_12 : f32 to vector<1x1xf32>
    %41 = arith.maximumf %39, %40 : vector<1x1xf32>
    %42 = tpu.reciprocal %41 {approx = true} : vector<1x1xf32> -> vector<1x1xf32>
    %43 = vector.broadcast %31 : vector<1x1xf32> to vector<96x32xf32>
    %44 = arith.subf %5, %43 : vector<96x32xf32>
    %45 = vector.broadcast %42 : vector<1x1xf32> to vector<96x32xf32>
    %46 = arith.mulf %44, %45 : vector<96x32xf32>
    %cst_13 = arith.constant 0.000000e+00 : f32
    %47 = vector.broadcast %cst_13 : f32 to vector<96x32xf32>
    %48 = arith.select %24, %46, %47 : vector<96x32xi1>, vector<96x32xf32>
    %c0_14 = arith.constant 0 : index
    %c0_15 = arith.constant 0 : index
    %49 = vector.load %arg4[%c0_14, %c0_15] : memref<96x32xf32, #tpu.memory_space<vmem>>, vector<96x32xf32>
    tpu.vector_store %arg4[%c0_14, %c0_15], %48 {strides = array<i32>} : memref<96x32xf32, #tpu.memory_space<vmem>>, vector<96x32xf32>,
    return
  }
  func.func @transform_0(%arg0: i32) -> (i32, i32) {
    %c0_i32 = arith.constant 0 : i32
    %c0_i32_0 = arith.constant 0 : i32
    %c0_i32_1 = arith.constant 0 : i32
    return %c0_i32, %c0_i32_0 : i32, i32
  }
  func.func @transform_1(%arg0: i32) -> (i32, i32) {
    %c0_i32 = arith.constant 0 : i32
    %c0_i32_0 = arith.constant 0 : i32
    %c0_i32_1 = arith.constant 0 : i32
    return %c0_i32, %c0_i32_0 : i32, i32
  }
  func.func @transform_2(%arg0: i32) -> (i32, i32) {
    %c0_i32 = arith.constant 0 : i32
    %c0_i32_0 = arith.constant 0 : i32
    %c0_i32_1 = arith.constant 0 : i32
    return %c0_i32, %c0_i32_0 : i32, i32
  }
  func.func @transform_3(%arg0: i32) -> (i32, i32) {
    %c0_i32 = arith.constant 0 : i32
    %c0_i32_0 = arith.constant 0 : i32
    %c0_i32_1 = arith.constant 0 : i32
    return %c0_i32, %c0_i32_0 : i32, i32
  }
}

module attributes {stable_mosaic.version = 11 : i64} {
  func.func @_encoder_kernel(%arg0: i32, %arg1: memref<8x192xf32, #tpu.memory_space<vmem>>, %arg2: memref<192x128xbf16, #tpu.memory_space<vmem>>, %arg3: memref<1x128xf32, #tpu.memory_space<vmem>>, %arg4: memref<128x128xbf16, #tpu.memory_space<vmem>>, %arg5: memref<1x128xf32, #tpu.memory_space<vmem>>, %arg6: memref<8x128xf32, #tpu.memory_space<vmem>>) attributes {dimension_semantics = [#tpu.dimension_semantics<parallel>], iteration_bounds = array<i64: 2>, scalar_prefetch = 0 : i64, scratch_operands = 0 : i64, tpu.core_type = #tpu.core_type<tc>, window_params = [{transform_indices = @transform_0, window_bounds = array<i64: 8, 192>}, {pipeline_mode = #tpu.pipeline_mode<synchronous>, transform_indices = @transform_1, window_bounds = array<i64: 192, 128>}, {pipeline_mode = #tpu.pipeline_mode<synchronous>, transform_indices = @transform_2, window_bounds = array<i64: 1, 128>}, {pipeline_mode = #tpu.pipeline_mode<synchronous>, transform_indices = @transform_3, window_bounds = array<i64: 128, 128>}, {pipeline_mode = #tpu.pipeline_mode<synchronous>, transform_indices = @transform_4, window_bounds = array<i64: 1, 128>}, {transform_indices = @transform_5, window_bounds = array<i64: 8, 128>}]} {
    %c0 = arith.constant 0 : index
    %c0_0 = arith.constant 0 : index
    %0 = vector.load %arg1[%c0, %c0_0] : memref<8x192xf32, #tpu.memory_space<vmem>>, vector<8x192xf32>
    %1 = arith.truncf %0 : vector<8x192xf32> to vector<8x192xbf16>
    %c0_1 = arith.constant 0 : index
    %c0_2 = arith.constant 0 : index
    %2 = vector.load %arg2[%c0_1, %c0_2] : memref<192x128xbf16, #tpu.memory_space<vmem>>, vector<192x128xbf16>
    %cst = arith.constant dense<0.000000e+00> : vector<8x128xf32>
    %3 = tpu.matmul %1, %2, %cst {dimension_numbers = #tpu.dot_dimension_numbers<[1], [0], [0], [1], [0, 0, 1, 1], [], []>} : vector<8x192xbf16>, vector<192x128xbf16>, vector<8x128xf32> -> vector<8x128xf32>
    %c0_3 = arith.constant 0 : index
    %c0_4 = arith.constant 0 : index
    %4 = vector.load %arg3[%c0_3, %c0_4] : memref<1x128xf32, #tpu.memory_space<vmem>>, vector<1x128xf32>
    %5 = vector.broadcast %4 : vector<1x128xf32> to vector<8x128xf32>
    %6 = arith.addf %3, %5 : vector<8x128xf32>
    %7 = arith.mulf %6, %6 : vector<8x128xf32>
    %8 = arith.mulf %6, %7 : vector<8x128xf32>
    %cst_5 = arith.constant 4.471500e-02 : f32
    %9 = vector.broadcast %cst_5 : f32 to vector<8x128xf32>
    %10 = arith.mulf %9, %8 : vector<8x128xf32>
    %11 = arith.addf %6, %10 : vector<8x128xf32>
    %cst_6 = arith.constant 0.797884583 : f32
    %12 = vector.broadcast %cst_6 : f32 to vector<8x128xf32>
    %13 = arith.mulf %12, %11 : vector<8x128xf32>
    %14 = math.tanh %13 : vector<8x128xf32>
    %cst_7 = arith.constant 1.000000e+00 : f32
    %15 = vector.broadcast %cst_7 : f32 to vector<8x128xf32>
    %16 = arith.addf %15, %14 : vector<8x128xf32>
    %cst_8 = arith.constant 5.000000e-01 : f32
    %17 = vector.broadcast %cst_8 : f32 to vector<8x128xf32>
    %18 = arith.mulf %17, %16 : vector<8x128xf32>
    %19 = arith.mulf %6, %18 : vector<8x128xf32>
    %20 = arith.truncf %19 : vector<8x128xf32> to vector<8x128xbf16>
    %c0_9 = arith.constant 0 : index
    %c0_10 = arith.constant 0 : index
    %21 = vector.load %arg4[%c0_9, %c0_10] : memref<128x128xbf16, #tpu.memory_space<vmem>>, vector<128x128xbf16>
    %cst_11 = arith.constant dense<0.000000e+00> : vector<8x128xf32>
    %22 = tpu.matmul %20, %21, %cst_11 {dimension_numbers = #tpu.dot_dimension_numbers<[1], [0], [0], [1], [0, 0, 1, 1], [], []>} : vector<8x128xbf16>, vector<128x128xbf16>, vector<8x128xf32> -> vector<8x128xf32>
    %c0_12 = arith.constant 0 : index
    %c0_13 = arith.constant 0 : index
    %23 = vector.load %arg5[%c0_12, %c0_13] : memref<1x128xf32, #tpu.memory_space<vmem>>, vector<1x128xf32>
    %24 = vector.broadcast %23 : vector<1x128xf32> to vector<8x128xf32>
    %25 = arith.addf %22, %24 : vector<8x128xf32>
    %c0_14 = arith.constant 0 : index
    %c0_15 = arith.constant 0 : index
    %26 = vector.load %arg6[%c0_14, %c0_15] : memref<8x128xf32, #tpu.memory_space<vmem>>, vector<8x128xf32>
    tpu.vector_store %arg6[%c0_14, %c0_15], %25 {strides = array<i32>} : memref<8x128xf32, #tpu.memory_space<vmem>>, vector<8x128xf32>,
    return
  }
  func.func @transform_0(%arg0: i32) -> (i32, i32) {
    %c0_i32 = arith.constant 0 : i32
    %c0_i32_0 = arith.constant 0 : i32
    return %arg0, %c0_i32 : i32, i32
  }
  func.func @transform_1(%arg0: i32) -> (i32, i32) {
    %c0_i32 = arith.constant 0 : i32
    %c0_i32_0 = arith.constant 0 : i32
    %c0_i32_1 = arith.constant 0 : i32
    return %c0_i32, %c0_i32_0 : i32, i32
  }
  func.func @transform_2(%arg0: i32) -> (i32, i32) {
    %c0_i32 = arith.constant 0 : i32
    %c0_i32_0 = arith.constant 0 : i32
    %c0_i32_1 = arith.constant 0 : i32
    return %c0_i32, %c0_i32_0 : i32, i32
  }
  func.func @transform_3(%arg0: i32) -> (i32, i32) {
    %c0_i32 = arith.constant 0 : i32
    %c0_i32_0 = arith.constant 0 : i32
    %c0_i32_1 = arith.constant 0 : i32
    return %c0_i32, %c0_i32_0 : i32, i32
  }
  func.func @transform_4(%arg0: i32) -> (i32, i32) {
    %c0_i32 = arith.constant 0 : i32
    %c0_i32_0 = arith.constant 0 : i32
    %c0_i32_1 = arith.constant 0 : i32
    return %c0_i32, %c0_i32_0 : i32, i32
  }
  func.func @transform_5(%arg0: i32) -> (i32, i32) {
    %c0_i32 = arith.constant 0 : i32
    %c0_i32_0 = arith.constant 0 : i32
    return %arg0, %c0_i32 : i32, i32
  }
}

</mosaic_0001>

<llo_original>
// kernel: run.2
$region0: #{run.2}
  #allocation0 [shape = 'u32[]', space=smem, size = 0x4, offset = 0x4, fixed_abs, tag = 'smem constant byte address 0x4 - core index']
  #allocation1 [shape = 'u32[144,128]{1,0:T(1,128)}', space=vmem, size = 0x12000, scoped, tag = 'internal scratch']
  %s0 = inlined_call_operand.vmem [shape: bf16[72,20], index: 0, kind: input, shape index: {}]
  %s1 = inlined_call_operand.vmem [shape: bf16[96,72], index: 1, kind: input, shape index: {}]
  %s2 = inlined_call_operand.vmem [shape: bf16[20,32], index: 2, kind: input, shape index: {}]
  %s3 = inlined_call_operand.vmem [shape: f32[96,32], index: 3, kind: output, shape index: {}]
  %s4 = sld [smem:[#allocation0]]
  $region22: #{run.2} parent=0
    _
  %s6 = ssub.s32 1, %s4
  %s7 = scalar_select 0, %s6, %s4
  // Predicated region
  $region2: #{run.2} parent=0 // pred_check
    _
  $region3: #{run.2} parent=0 // pred_check_branch
    %9 = sbr.rel (0) target = $region5
  $region4: #{run.2} parent=0 // pred_region
    _
  $region5: #{run.2} parent=0 // pred_fallthru
    _
  // Predicated region
  $region6: #{run.2} parent=0 // pred_check
    _
  $region7: #{run.2} parent=0 // pred_check_branch
    %11 = sbr.rel (0) target = $region9
  $region8: #{run.2} parent=0 // pred_region
    _
  $region9: #{run.2} parent=0 // pred_fallthru
    _
  // Predicated region
  $region10: #{run.2} parent=0 // pred_check
    _
  $region11: #{run.2} parent=0 // pred_check_branch
    %13 = sbr.rel (0) target = $region13
  $region12: #{run.2} parent=0 // pred_region
    _
  $region13: #{run.2} parent=0 // pred_fallthru
    _
  %v15 = vld [vmem:[%s0] sm:$0xf]
  %v16 = vld [vmem:[%s0 + $0x4] sm:$0xf]
  %v17 = vld [vmem:[%s0 + $0x8] sm:$0xf]
  %v18 = vld [vmem:[%s0 + $0xc] sm:$0xf]
  %v19 = vld [vmem:[%s0 + $0x10] sm:$0xf]
  %v20 = vld [vmem:[%s0 + $0x14] sm:$0xf]
  %v21 = vld [vmem:[%s0 + $0x18] sm:$0xf]
  %v22 = vld [vmem:[%s0 + $0x1c] sm:$0xf]
  %v23 = vld [vmem:[%s0 + $0x20] sm:$0xf]
  %v24 = vld [vmem:[%s2] sm:$0xf]
  %v25 = vld [vmem:[%s2 + $0x4] sm:$0xf]
  %v26 = vld [vmem:[%s2 + $0x8] sm:$0x3]
  %v36 = vunpack.c.l.b16 %v15
  %v37 = vunpack.c.l.b16 %v16
  %v38 = vunpack.c.l.b16 %v17
  %v39 = vunpack.c.l.b16 %v18
  %v40 = vunpack.c.l.b16 %v19
  %v41 = vunpack.c.l.b16 %v20
  %v42 = vunpack.c.l.b16 %v21
  %v43 = vunpack.c.l.b16 %v22
  %v44 = vunpack.c.l.b16 %v23
  %v45 = vpack.c.b16 %v37, %v36
  %v46 = vpack.c.b16 %v39, %v38
  %v47 = vpack.c.b16 %v41, %v40
  %v48 = vpack.c.b16 %v43, %v42
  %v49 = vpack.c.b16 %v44, %v44
  %v53 = vunpack.c.l.b16 %v24
  %v54 = vunpack.c.l.b16 %v25
  %v55 = vunpack.c.l.b16 %v26
  %v56 = vpack.c.b16 %v54, %v53
  %v57 = vpack.c.b16 %v55, %v55
  %vm59 = vcmask 162816
  %v61 = vsel %vm59, %v45, 0
  %v64 = vsel %vm59, %v46, 0
  %v67 = vsel %vm59, %v47, 0
  %v70 = vsel %vm59, %v48, 0
  %v73 = vsel %vm59, %v49, 0
  %vm75 = vcmask 1041408
  %v77 = vsel %vm75, %v57, 0
  %79 = vmatprep.subr.bf16.mxu0 0
  %80 = vmatpush1.bf16.msra.mxu0 %v56
  %81 = vmatprep.subr.bf16.mxu0 0
  %82 = vmatpush1.bf16.msra.mxu0 %v77
  %83 = vmatprep.subr.bf16.mxu0 0
  %84 = vmatpush1.bf16.msra.mxu0 0
  %85 = vmatprep.subr.bf16.mxu0 0
  %86 = vmatpush1.bf16.msra.mxu0 0
  %87 = vmatprep.subr.bf16.mxu0 0
  %88 = vmatpush1.bf16.msra.mxu0 0
  %89 = vmatprep.subr.bf16.mxu0 0
  %90 = vmatpush1.bf16.msra.mxu0 0
  %91 = vmatprep.subr.bf16.mxu0 0
  %92 = vmatpush1.bf16.msra.mxu0 0
  %93 = vmatprep.subr.bf16.mxu0 0
  %94 = vmatpush1.bf16.msra.mxu0 0
  %95 = vmatprep.subr.bf16.mxu0 0
  %96 = vmatpush1.bf16.msra.mxu0 0
  %97 = vmatprep.subr.bf16.mxu0 0
  %98 = vmatpush1.bf16.msra.mxu0 0
  %99 = vmatprep.subr.bf16.mxu0 0
  %100 = vmatpush1.bf16.msra.mxu0 0
  %101 = vmatprep.subr.bf16.mxu0 0
  %102 = vmatpush1.bf16.msra.mxu0 0
  %103 = vmatprep.subr.bf16.mxu0 0
  %104 = vmatpush1.bf16.msra.mxu0 0
  %105 = vmatprep.subr.bf16.mxu0 0
  %106 = vmatpush1.bf16.msra.mxu0 0
  %107 = vmatprep.subr.bf16.mxu0 0
  %108 = vmatpush1.bf16.msra.mxu0 0
  %109 = vmatprep.subr.bf16.mxu0 0
  %110 = vmatpush1.bf16.msra.mxu0 0
  %111 = vmatprep.mubr.bf16.mxu0 0
  %112 = vmatmul.mubr.bf16.gmra.mrb[0].mxu0 %v61
  %v113 = vpop.f32.mrb[0].mxu0
  %v114 = vadd.f32 0.0, %v113
  %v115 = vpop.f32.mrb[0].mxu0
  %v116 = vpop.f32.mrb[0].mxu0
  %v117 = vadd.f32 0.0, %v116
  %v118 = vpop.f32.mrb[0].mxu0
  %119 = vmatprep.mubr.bf16.mxu0 0
  %120 = vmatmul.mubr.bf16.gmra.mrb[0].mxu0 %v64
  %v121 = vpop.f32.mrb[0].mxu0
  %v122 = vadd.f32 0.0, %v121
  %v123 = vpop.f32.mrb[0].mxu0
  %v124 = vpop.f32.mrb[0].mxu0
  %v125 = vadd.f32 0.0, %v124
  %v126 = vpop.f32.mrb[0].mxu0
  %127 = vmatprep.mubr.bf16.mxu0 0
  %128 = vmatmul.mubr.bf16.gmra.mrb[0].mxu0 %v67
  %v129 = vpop.f32.mrb[0].mxu0
  %v130 = vadd.f32 0.0, %v129
  %v131 = vpop.f32.mrb[0].mxu0
  %v132 = vpop.f32.mrb[0].mxu0
  %v133 = vadd.f32 0.0, %v132
  %v134 = vpop.f32.mrb[0].mxu0
  %135 = vmatprep.mubr.bf16.mxu0 0
  %136 = vmatmul.mubr.bf16.gmra.mrb[0].mxu0 %v70
  %v137 = vpop.f32.mrb[0].mxu0
  %v138 = vadd.f32 0.0, %v137
  %v139 = vpop.f32.mrb[0].mxu0
  %v140 = vpop.f32.mrb[0].mxu0
  %v141 = vadd.f32 0.0, %v140
  %v142 = vpop.f32.mrb[0].mxu0
  %143 = vmatprep.mubr.bf16.mxu0 0
  %144 = vmatmul.mubr.bf16.gmra.mrb[0].mxu0 %v73
  %v145 = vpop.f32.mrb[0].mxu0
  %v146 = vadd.f32 0.0, %v145
  %v147 = vpop.f32.mrb[0].mxu0
  %v148 = vpop.f32.mrb[0].mxu0
  %v149 = vpop.f32.mrb[0].mxu0
  %150 = vdwg.mxu0
  %v151 = vpack.c.bf16 %v117, %v114
  %v152 = vpack.c.bf16 %v125, %v122
  %v153 = vpack.c.bf16 %v133, %v130
  %v154 = vpack.c.bf16 %v141, %v138
  %v155 = vpack.c.bf16 %v146, %v146
  %v156 = vld [vmem:[%s1] sm:$0xf]
  %v157 = vld [vmem:[%s1 + $0x4] sm:$0xf]
  %v158 = vld [vmem:[%s1 + $0x8] sm:$0xf]
  %v159 = vld [vmem:[%s1 + $0xc] sm:$0xf]
  %v160 = vld [vmem:[%s1 + $0x10] sm:$0xf]
  %v161 = vld [vmem:[%s1 + $0x14] sm:$0xf]
  %v162 = vld [vmem:[%s1 + $0x18] sm:$0xf]
  %v163 = vld [vmem:[%s1 + $0x1c] sm:$0xf]
  %v164 = vld [vmem:[%s1 + $0x20] sm:$0xf]
  %v165 = vld [vmem:[%s1 + $0x24] sm:$0xf]
  %v166 = vld [vmem:[%s1 + $0x28] sm:$0xf]
  %v167 = vld [vmem:[%s1 + $0x2c] sm:$0xf]
  %v180 = vunpack.c.l.b16 %v156
  %v181 = vunpack.c.l.b16 %v157
  %v182 = vunpack.c.l.b16 %v158
  %v183 = vunpack.c.l.b16 %v159
  %v184 = vunpack.c.l.b16 %v160
  %v185 = vunpack.c.l.b16 %v161
  %v186 = vunpack.c.l.b16 %v162
  %v187 = vunpack.c.l.b16 %v163
  %v188 = vunpack.c.l.b16 %v164
  %v189 = vunpack.c.l.b16 %v165
  %v190 = vunpack.c.l.b16 %v166
  %v191 = vunpack.c.l.b16 %v167
  %v192 = vpack.c.b16 %v181, %v180
  %v193 = vpack.c.b16 %v183, %v182
  %v194 = vpack.c.b16 %v185, %v184
  %v195 = vpack.c.b16 %v187, %v186
  %v196 = vpack.c.b16 %v189, %v188
  %v197 = vpack.c.b16 %v191, %v190
  %vm198 = vcmask 588800
  %v200 = vsel %vm198, %v192, 0
  %v203 = vsel %vm198, %v193, 0
  %v206 = vsel %vm198, %v194, 0
  %v209 = vsel %vm198, %v195, 0
  %v212 = vsel %vm198, %v196, 0
  %v215 = vsel %vm198, %v197, 0
  %vm217 = vcmask 1043456
  %v219 = vsel %vm217, %v155, 0
  %221 = vmatprep.subr.bf16.mxu0 0
  %222 = vmatpush1.bf16.msra.mxu0 %v151
  %223 = vmatprep.subr.bf16.mxu0 0
  %224 = vmatpush1.bf16.msra.mxu0 %v152
  %225 = vmatprep.subr.bf16.mxu0 0
  %226 = vmatpush1.bf16.msra.mxu0 %v153
  %227 = vmatprep.subr.bf16.mxu0 0
  %228 = vmatpush1.bf16.msra.mxu0 %v154
  %229 = vmatprep.subr.bf16.mxu0 0
  %230 = vmatpush1.bf16.msra.mxu0 %v219
  %231 = vmatprep.subr.bf16.mxu0 0
  %232 = vmatpush1.bf16.msra.mxu0 0
  %233 = vmatprep.subr.bf16.mxu0 0
  %234 = vmatpush1.bf16.msra.mxu0 0
  %235 = vmatprep.subr.bf16.mxu0 0
  %236 = vmatpush1.bf16.msra.mxu0 0
  %237 = vmatprep.subr.bf16.mxu0 0
  %238 = vmatpush1.bf16.msra.mxu0 0
  %239 = vmatprep.subr.bf16.mxu0 0
  %240 = vmatpush1.bf16.msra.mxu0 0
  %241 = vmatprep.subr.bf16.mxu0 0
  %242 = vmatpush1.bf16.msra.mxu0 0
  %243 = vmatprep.subr.bf16.mxu0 0
  %244 = vmatpush1.bf16.msra.mxu0 0
  %245 = vmatprep.subr.bf16.mxu0 0
  %246 = vmatpush1.bf16.msra.mxu0 0
  %247 = vmatprep.subr.bf16.mxu0 0
  %248 = vmatpush1.bf16.msra.mxu0 0
  %249 = vmatprep.subr.bf16.mxu0 0
  %250 = vmatpush1.bf16.msra.mxu0 0
  %251 = vmatprep.subr.bf16.mxu0 0
  %252 = vmatpush1.bf16.msra.mxu0 0
  %253 = vmatprep.mubr.bf16.mxu0 0
  %254 = vmatmul.mubr.bf16.gmra.mrb[0].mxu0 %v200
  %v255 = vpop.f32.mrb[0].mxu0
  %v256 = vadd.f32 0.0, %v255
  %v257 = vpop.f32.mrb[0].mxu0
  %v258 = vpop.f32.mrb[0].mxu0
  %v259 = vadd.f32 0.0, %v258
  %v260 = vpop.f32.mrb[0].mxu0
  %261 = vmatprep.mubr.bf16.mxu0 0
  %262 = vmatmul.mubr.bf16.gmra.mrb[0].mxu0 %v203
  %v263 = vpop.f32.mrb[0].mxu0
  %v264 = vadd.f32 0.0, %v263
  %v265 = vpop.f32.mrb[0].mxu0
  %v266 = vpop.f32.mrb[0].mxu0
  %v267 = vadd.f32 0.0, %v266
  %v268 = vpop.f32.mrb[0].mxu0
  %269 = vmatprep.mubr.bf16.mxu0 0
  %270 = vmatmul.mubr.bf16.gmra.mrb[0].mxu0 %v206
  %v271 = vpop.f32.mrb[0].mxu0
  %v272 = vadd.f32 0.0, %v271
  %v273 = vpop.f32.mrb[0].mxu0
  %v274 = vpop.f32.mrb[0].mxu0
  %v275 = vadd.f32 0.0, %v274
  %v276 = vpop.f32.mrb[0].mxu0
  %277 = vmatprep.mubr.bf16.mxu0 0
  %278 = vmatmul.mubr.bf16.gmra.mrb[0].mxu0 %v209
  %v279 = vpop.f32.mrb[0].mxu0
  %v280 = vadd.f32 0.0, %v279
  %v281 = vpop.f32.mrb[0].mxu0
  %v282 = vpop.f32.mrb[0].mxu0
  %v283 = vadd.f32 0.0, %v282
  %v284 = vpop.f32.mrb[0].mxu0
  %285 = vmatprep.mubr.bf16.mxu0 0
  %286 = vmatmul.mubr.bf16.gmra.mrb[0].mxu0 %v212
  %v287 = vpop.f32.mrb[0].mxu0
  %v288 = vadd.f32 0.0, %v287
  %v289 = vpop.f32.mrb[0].mxu0
  %v290 = vpop.f32.mrb[0].mxu0
  %v291 = vadd.f32 0.0, %v290
  %v292 = vpop.f32.mrb[0].mxu0
  %293 = vmatprep.mubr.bf16.mxu0 0
  %294 = vmatmul.mubr.bf16.gmra.mrb[0].mxu0 %v215
  %v295 = vpop.f32.mrb[0].mxu0
  %v296 = vadd.f32 0.0, %v295
  %v297 = vpop.f32.mrb[0].mxu0
  %v298 = vpop.f32.mrb[0].mxu0
  %v299 = vadd.f32 0.0, %v298
  %v300 = vpop.f32.mrb[0].mxu0
  %301 = vdwg.mxu0
  %v302 = vlaneseq
  %v303 = vshrl.u32 %v302, 7
  %v304 = vadd.s32 %v303, 8
  %v305 = vadd.s32 %v303, 16
  %v306 = vadd.s32 %v303, 24
  %v307 = vadd.s32 %v303, 32
  %v308 = vadd.s32 %v303, 40
  %v309 = vadd.s32 %v303, 48
  %v310 = vadd.s32 %v303, 56
  %v311 = vadd.s32 %v303, 64
  %v312 = vadd.s32 %v303, 72
  %v313 = vadd.s32 %v303, 80
  %v314 = vadd.s32 %v303, 88
  %v315 = vlaneseq
  %v316 = vand.u32 %v315, 127
  %vm317 = vcmp.lt.s32.totalorder %v303, 32
  %vm318 = vcmp.lt.s32.totalorder %v304, 32
  %vm319 = vcmp.lt.s32.totalorder %v305, 32
  %vm320 = vcmp.lt.s32.totalorder %v306, 32
  %vm321 = vcmp.lt.s32.totalorder %v307, 32
  %vm322 = vcmp.lt.s32.totalorder %v308, 32
  %vm323 = vcmp.lt.s32.totalorder %v309, 32
  %vm324 = vcmp.lt.s32.totalorder %v310, 32
  %vm325 = vcmp.lt.s32.totalorder %v311, 32
  %vm326 = vcmp.lt.s32.totalorder %v312, 32
  %vm327 = vcmp.lt.s32.totalorder %v313, 32
  %vm328 = vcmp.lt.s32.totalorder %v314, 32
  %vm329 = vcmp.ge.s32.totalorder %v303, 32
  %vm330 = vcmp.ge.s32.totalorder %v304, 32
  %vm331 = vcmp.ge.s32.totalorder %v305, 32
  %vm332 = vcmp.ge.s32.totalorder %v306, 32
  %vm333 = vcmp.ge.s32.totalorder %v307, 32
  %vm334 = vcmp.ge.s32.totalorder %v308, 32
  %vm335 = vcmp.ge.s32.totalorder %v309, 32
  %vm336 = vcmp.ge.s32.totalorder %v310, 32
  %vm337 = vcmp.ge.s32.totalorder %v311, 32
  %vm338 = vcmp.ge.s32.totalorder %v312, 32
  %vm339 = vcmp.ge.s32.totalorder %v313, 32
  %vm340 = vcmp.ge.s32.totalorder %v314, 32
  %vm341 = vcmp.lt.s32.totalorder %v303, 64
  %vm342 = vcmp.lt.s32.totalorder %v304, 64
  %vm343 = vcmp.lt.s32.totalorder %v305, 64
  %vm344 = vcmp.lt.s32.totalorder %v306, 64
  %vm345 = vcmp.lt.s32.totalorder %v307, 64
  %vm346 = vcmp.lt.s32.totalorder %v308, 64
  %vm347 = vcmp.lt.s32.totalorder %v309, 64
  %vm348 = vcmp.lt.s32.totalorder %v310, 64
  %vm349 = vcmp.lt.s32.totalorder %v311, 64
  %vm350 = vcmp.lt.s32.totalorder %v312, 64
  %vm351 = vcmp.lt.s32.totalorder %v313, 64
  %vm352 = vcmp.lt.s32.totalorder %v314, 64
  %vm353 = vmand %vm329, %vm341
  %vm354 = vmand %vm330, %vm342
  %vm355 = vmand %vm331, %vm343
  %vm356 = vmand %vm332, %vm344
  %vm357 = vmand %vm333, %vm345
  %vm358 = vmand %vm334, %vm346
  %vm359 = vmand %vm335, %vm347
  %vm360 = vmand %vm336, %vm348
  %vm361 = vmand %vm337, %vm349
  %vm362 = vmand %vm338, %vm350
  %vm363 = vmand %vm339, %vm351
  %vm364 = vmand %vm340, %vm352
  %vm365 = vmor %vm317, %vm353
  %vm366 = vmor %vm318, %vm354
  %vm367 = vmor %vm319, %vm355
  %vm368 = vmor %vm320, %vm356
  %vm369 = vmor %vm321, %vm357
  %vm370 = vmor %vm322, %vm358
  %vm371 = vmor %vm323, %vm359
  %vm372 = vmor %vm324, %vm360
  %vm373 = vmor %vm325, %vm361
  %vm374 = vmor %vm326, %vm362
  %vm375 = vmor %vm327, %vm363
  %vm376 = vmor %vm328, %vm364
  %vm377 = vcmp.ge.s32.totalorder %v303, 64
  %vm378 = vcmp.ge.s32.totalorder %v304, 64
  %vm379 = vcmp.ge.s32.totalorder %v305, 64
  %vm380 = vcmp.ge.s32.totalorder %v306, 64
  %vm381 = vcmp.ge.s32.totalorder %v307, 64
  %vm382 = vcmp.ge.s32.totalorder %v308, 64
  %vm383 = vcmp.ge.s32.totalorder %v309, 64
  %vm384 = vcmp.ge.s32.totalorder %v310, 64
  %vm385 = vcmp.ge.s32.totalorder %v311, 64
  %vm386 = vcmp.ge.s32.totalorder %v312, 64
  %vm387 = vcmp.ge.s32.totalorder %v313, 64
  %vm388 = vcmp.ge.s32.totalorder %v314, 64
  %vm389 = vcmp.lt.s32.totalorder %v303, 96
  %vm390 = vcmp.lt.s32.totalorder %v304, 96
  %vm391 = vcmp.lt.s32.totalorder %v305, 96
  %vm392 = vcmp.lt.s32.totalorder %v306, 96
  %vm393 = vcmp.lt.s32.totalorder %v307, 96
  %vm394 = vcmp.lt.s32.totalorder %v308, 96
  %vm395 = vcmp.lt.s32.totalorder %v309, 96
  %vm396 = vcmp.lt.s32.totalorder %v310, 96
  %vm397 = vcmp.lt.s32.totalorder %v311, 96
  %vm398 = vcmp.lt.s32.totalorder %v312, 96
  %vm399 = vcmp.lt.s32.totalorder %v313, 96
  %vm400 = vcmp.lt.s32.totalorder %v314, 96
  %vm401 = vmand %vm377, %vm389
  %vm402 = vmand %vm378, %vm390
  %vm403 = vmand %vm379, %vm391
  %vm404 = vmand %vm380, %vm392
  %vm405 = vmand %vm381, %vm393
  %vm406 = vmand %vm382, %vm394
  %vm407 = vmand %vm383, %vm395
  %vm408 = vmand %vm384, %vm396
  %vm409 = vmand %vm385, %vm397
  %vm410 = vmand %vm386, %vm398
  %vm411 = vmand %vm387, %vm399
  %vm412 = vmand %vm388, %vm400
  %vm413 = vmor %vm365, %vm401
  %vm414 = vmor %vm366, %vm402
  %vm415 = vmor %vm367, %vm403
  %vm416 = vmor %vm368, %vm404
  %vm417 = vmor %vm369, %vm405
  %vm418 = vmor %vm370, %vm406
  %vm419 = vmor %vm371, %vm407
  %vm420 = vmor %vm372, %vm408
  %vm421 = vmor %vm373, %vm409
  %vm422 = vmor %vm374, %vm410
  %vm423 = vmor %vm375, %vm411
  %vm424 = vmor %vm376, %vm412
  %vm425 = vcmp.lt.s32.totalorder %v316, 27
  %vm426 = vmand %vm413, %vm425
  %vm427 = vmand %vm414, %vm425
  %vm428 = vmand %vm415, %vm425
  %vm429 = vmand %vm416, %vm425
  %vm430 = vmand %vm417, %vm425
  %vm431 = vmand %vm418, %vm425
  %vm432 = vmand %vm419, %vm425
  %vm433 = vmand %vm420, %vm425
  %vm434 = vmand %vm421, %vm425
  %vm435 = vmand %vm422, %vm425
  %vm436 = vmand %vm423, %vm425
  %vm437 = vmand %vm424, %vm425
  %v438 = vsel %vm426, %v256, inf
  %v439 = vsel %vm427, %v259, inf
  %v440 = vsel %vm428, %v264, inf
  %v441 = vsel %vm429, %v267, inf
  %v442 = vsel %vm430, %v272, inf
  %v443 = vsel %vm431, %v275, inf
  %v444 = vsel %vm432, %v280, inf
  %v445 = vsel %vm433, %v283, inf
  %v446 = vsel %vm434, %v288, inf
  %v447 = vsel %vm435, %v291, inf
  %v448 = vsel %vm436, %v296, inf
  %v449 = vsel %vm437, %v299, inf
  %vm450 = vcmask 261120
  %v451 = vsel %vm450, %v438, inf
  %v452 = vsel %vm450, %v439, inf
  %v453 = vsel %vm450, %v440, inf
  %v454 = vsel %vm450, %v441, inf
  %v455 = vsel %vm450, %v442, inf
  %v456 = vmin.f32 %v451, %v455
  %v457 = vsel %vm450, %v443, inf
  %v458 = vmin.f32 %v452, %v457
  %v459 = vsel %vm450, %v444, inf
  %v460 = vmin.f32 %v453, %v459
  %v461 = vsel %vm450, %v445, inf
  %v462 = vmin.f32 %v454, %v461
  %v463 = vsel %vm450, %v446, inf
  %v464 = vmin.f32 %v456, %v463
  %v465 = vsel %vm450, %v447, inf
  %v466 = vmin.f32 %v458, %v465
  %v467 = vsel %vm450, %v448, inf
  %v468 = vmin.f32 %v460, %v467
  %v469 = vsel %vm450, %v449, inf
  %v470 = vmin.f32 %v462, %v469
  %v471 = vmin.f32 %v464, %v466
  %v472 = vmin.f32 %v468, %v470
  %v473 = vmin.f32 %v471, %v472
  %474 = vmin.xlane.f32.xlu0 %v473
  %v475 = vpop.xlane.xlu0 %474
  %v476 = vrot.slane %v475, 4
  %v477 = vmin.f32 %v475, %v476
  %v478 = vrot.slane %v477, 2
  %v479 = vmin.f32 %v477, %v478
  %v480 = vrot.slane %v479, 1
  %v481 = vmin.f32 %v479, %v480
  %s482 = vtos %v481
  %v483 = vstv %s482
  %v484 = vsel %vm426, %v256, -inf
  %v485 = vsel %vm427, %v259, -inf
  %v486 = vsel %vm428, %v264, -inf
  %v487 = vsel %vm429, %v267, -inf
  %v488 = vsel %vm430, %v272, -inf
  %v489 = vsel %vm431, %v275, -inf
  %v490 = vsel %vm432, %v280, -inf
  %v491 = vsel %vm433, %v283, -inf
  %v492 = vsel %vm434, %v288, -inf
  %v493 = vsel %vm435, %v291, -inf
  %v494 = vsel %vm436, %v296, -inf
  %v495 = vsel %vm437, %v299, -inf
  %v496 = vsel %vm450, %v484, -inf
  %v497 = vsel %vm450, %v485, -inf
  %v498 = vsel %vm450, %v486, -inf
  %v499 = vsel %vm450, %v487, -inf
  %v500 = vsel %vm450, %v488, -inf
  %v501 = vmax.f32 %v496, %v500
  %v502 = vsel %vm450, %v489, -inf
  %v503 = vmax.f32 %v497, %v502
  %v504 = vsel %vm450, %v490, -inf
  %v505 = vmax.f32 %v498, %v504
  %v506 = vsel %vm450, %v491, -inf
  %v507 = vmax.f32 %v499, %v506
  %v508 = vsel %vm450, %v492, -inf
  %v509 = vmax.f32 %v501, %v508
  %v510 = vsel %vm450, %v493, -inf
  %v511 = vmax.f32 %v503, %v510
  %v512 = vsel %vm450, %v494, -inf
  %v513 = vmax.f32 %v505, %v512
  %v514 = vsel %vm450, %v495, -inf
  %v515 = vmax.f32 %v507, %v514
  %v516 = vmax.f32 %v509, %v511
  %v517 = vmax.f32 %v513, %v515
  %v518 = vmax.f32 %v516, %v517
  %519 = vmax.xlane.f32.xlu0 %v518
  %v520 = vpop.xlane.xlu0 %519
  %v521 = vrot.slane %v520, 4
  %v522 = vmax.f32 %v520, %v521
  %v523 = vrot.slane %v522, 2
  %v524 = vmax.f32 %v522, %v523
  %v525 = vrot.slane %v524, 1
  %v526 = vmax.f32 %v524, %v525
  %s527 = vtos %v526
  %v528 = vstv %s527
  %v529 = vsub.f32 %v528, %v483
  %v530 = vmax.f32 %v529, 1e-08
  %v531 = vrcp.pop %v530
  %v532 = vsub.f32 %v256, %v483
  %v533 = vsub.f32 %v259, %v483
  %v534 = vsub.f32 %v264, %v483
  %v535 = vsub.f32 %v267, %v483
  %v536 = vsub.f32 %v272, %v483
  %v537 = vsub.f32 %v275, %v483
  %v538 = vsub.f32 %v280, %v483
  %v539 = vsub.f32 %v283, %v483
  %v540 = vsub.f32 %v288, %v483
  %v541 = vsub.f32 %v291, %v483
  %v542 = vsub.f32 %v296, %v483
  %v543 = vsub.f32 %v299, %v483
  %v544 = vmul.f32 %v532, %v531
  %v545 = vmul.f32 %v533, %v531
  %v546 = vmul.f32 %v534, %v531
  %v547 = vmul.f32 %v535, %v531
  %v548 = vmul.f32 %v536, %v531
  %v549 = vmul.f32 %v537, %v531
  %v550 = vmul.f32 %v538, %v531
  %v551 = vmul.f32 %v539, %v531
  %v552 = vmul.f32 %v540, %v531
  %v553 = vmul.f32 %v541, %v531
  %v554 = vmul.f32 %v542, %v531
  %v555 = vmul.f32 %v543, %v531
  %v556 = vsel %vm426, %v544, 0.0
  %v557 = vsel %vm427, %v545, 0.0
  %v558 = vsel %vm428, %v546, 0.0
  %v559 = vsel %vm429, %v547, 0.0
  %v560 = vsel %vm430, %v548, 0.0
  %v561 = vsel %vm431, %v549, 0.0
  %v562 = vsel %vm432, %v550, 0.0
  %v563 = vsel %vm433, %v551, 0.0
  %v564 = vsel %vm434, %v552, 0.0
  %v565 = vsel %vm435, %v553, 0.0
  %v566 = vsel %vm436, %v554, 0.0
  %v567 = vsel %vm437, %v555, 0.0
  %568 = vst.msk [vmem:[%s3] sm:$0xff] %vm450, %v556
  %569 = vst.msk [vmem:[%s3 + $0x8] sm:$0xff] %vm450, %v557
  %570 = vst.msk [vmem:[%s3 + $0x10] sm:$0xff] %vm450, %v558
  %571 = vst.msk [vmem:[%s3 + $0x18] sm:$0xff] %vm450, %v559
  %572 = vst.msk [vmem:[%s3 + $0x20] sm:$0xff] %vm450, %v560
  %573 = vst.msk [vmem:[%s3 + $0x28] sm:$0xff] %vm450, %v561
  %574 = vst.msk [vmem:[%s3 + $0x30] sm:$0xff] %vm450, %v562
  %575 = vst.msk [vmem:[%s3 + $0x38] sm:$0xff] %vm450, %v563
  %576 = vst.msk [vmem:[%s3 + $0x40] sm:$0xff] %vm450, %v564
  %577 = vst.msk [vmem:[%s3 + $0x48] sm:$0xff] %vm450, %v565
  %578 = vst.msk [vmem:[%s3 + $0x50] sm:$0xff] %vm450, %v566
  %579 = vst.msk [vmem:[%s3 + $0x58] sm:$0xff] %vm450, %v567
  // Predicated region
  $region14: #{run.2} parent=0 // pred_check
    _
  $region15: #{run.2} parent=0 // pred_check_branch
    %581 = sbr.rel (0) target = $region17
  $region16: #{run.2} parent=0 // pred_region
    _
  $region17: #{run.2} parent=0 // pred_fallthru
    _
  // Predicated region
  $region18: #{run.2} parent=0 // pred_check
    _
  $region19: #{run.2} parent=0 // pred_check_branch
    %583 = sbr.rel (0) target = $region21
  $region20: #{run.2} parent=0 // pred_region
    _
  $region21: #{run.2} parent=0 // pred_fallthru
    _

// kernel: run.3
$region0: #{run.3}
  #allocation0 [shape = 'u32[]', space=smem, size = 0x4, offset = 0x4, fixed_abs, tag = 'smem constant byte address 0x4 - core index']
  #allocation1 [shape = 'u32[144,128]{1,0:T(1,128)}', space=vmem, size = 0x12000, scoped, tag = 'internal scratch']
  %s0 = inlined_call_operand.vmem [shape: f32[16,192], index: 0, kind: input, shape index: {}]
  %s1 = inlined_call_operand.vmem [shape: bf16[192,128], index: 1, kind: input, shape index: {}]
  %s2 = inlined_call_operand.vmem [shape: f32[1,128], index: 2, kind: input, shape index: {}]
  %s3 = inlined_call_operand.vmem [shape: bf16[128,128], index: 3, kind: input, shape index: {}]
  %s4 = inlined_call_operand.vmem [shape: f32[1,128], index: 4, kind: input, shape index: {}]
  %s5 = inlined_call_operand.hbm [shape: f32[16,128], index: 5, kind: output, shape index: {}]
  %s6 = sld [smem:[#allocation0]]
  $region53: #{run.3} parent=0
    _
  %s8 = ssub.s32 1, %s6
  %s9 = scalar_select 0, %s8, %s6
  $region1: #{run.3} parent=0
    #allocation2 [shape = 'u8[8192]{0}', space=vmem, size = 0x2000, scoped, tag = 'output window, operand 0']
    #allocation3 [shape = 's32[2]{0}', space=sflag, size = 0x8, scoped, tag = 'scoped memory for run.3']
    %10 = vsyncpa [#allocation3], 0
    %s11 = scalar_lea.sflag [#allocation3], 1
    %12 = vsyncpa %s11, 0
    loop: start=0, step=1, limit=4
    $region2: #{run.3} parent=1 // loop_pre_header
      _
    $region3: #{run.3} parent=1 // loop_header
      %s14 = sphi 0, %s18
      %p15 = scmp.ge.s32.totalorder %s14, 4
      %s24 = sphi 0, %s26
      %s27 = sphi 0, %s24
      %s28 = sphi 0, %s27
      %s44 = sphi 0, %s28
      %s48 = sphi 0, %s48
      %s50 = sphi 0, %s48
      %s51 = sphi 0, %s50
      %s65 = sphi 0, %s51
      %s69 = sphi 0, %s69
      %s71 = sphi 0, %s69
      %s72 = sphi 0, %s71
      %s86 = sphi 0, %s72
      %s90 = sphi 0, %s90
      %s92 = sphi 0, %s90
      %s93 = sphi 0, %s92
      %s107 = sphi 0, %s93
      %s111 = sphi 0, %s111
      %s113 = sphi 0, %s111
      %s114 = sphi 0, %s113
      %s128 = sphi 0, %s114
      %s134 = sphi 0, %s136
      %s137 = sphi 0, %s134
      %s138 = sphi 0, %s137
      %s154 = sphi 0, %s138
    $region4: #{run.3} parent=1 // loop_header_branch
      %17 = sbr.rel (%p15) target = $region8
    $region5: #{run.3} parent=1 // loop_body
      %s19 = ssub.s32 %s14, 1
      %s20 = ssub.s32 %s14, 2
      %s21 = sadd.s32 %s14, 1
      %s22 = ssub.s32 %s14, %s21
      %p23 = scmp.eq.s32.totalorder %s22, 0
      %s25 = sadd.s32 %s24, 1
      %s26 = scalar_select %p23, %s24, %s25
      %p29 = pneg %p23
      %p30 = scmp.eq.s32.totalorder %s14, 1
      %p31 = por %p29, %p30
      %p32 = scmp.ne.s32.totalorder %s24, %s27
      %p33 = scmp.eq.s32.totalorder %s14, 0
      %p34 = por %p32, %p33
      %p35 = scmp.ne.s32.totalorder %s24, %s27
      %p36 = scmp.eq.s32.totalorder %s19, 1
      %p37 = por %p35, %p36
      %p38 = scmp.ne.s32.totalorder %s27, %s28
      %p39 = scmp.eq.s32.totalorder %s19, 0
      %p40 = por %p38, %p39
      %p41 = scmp.ne.s32.totalorder %s27, %s28
      %p42 = scmp.eq.s32.totalorder %s20, 1
      %p43 = por %p41, %p42
      %p45 = scmp.ne.s32.totalorder %s28, %s44
      %p46 = scmp.eq.s32.totalorder %s20, 0
      %p47 = por %p45, %p46
      %s49 = sadd.s32 %s48, 1
      %p52 = scmp.eq.s32.totalorder %s14, 1
      %p53 = scmp.ne.s32.totalorder %s48, %s50
      %p54 = scmp.eq.s32.totalorder %s14, 0
      %p55 = por %p53, %p54
      %p56 = scmp.ne.s32.totalorder %s48, %s50
      %p57 = scmp.eq.s32.totalorder %s19, 1
      %p58 = por %p56, %p57
      %p59 = scmp.ne.s32.totalorder %s50, %s51
      %p60 = scmp.eq.s32.totalorder %s19, 0
      %p61 = por %p59, %p60
      %p62 = scmp.ne.s32.totalorder %s50, %s51
      %p63 = scmp.eq.s32.totalorder %s20, 1
      %p64 = por %p62, %p63
      %p66 = scmp.ne.s32.totalorder %s51, %s65
      %p67 = scmp.eq.s32.totalorder %s20, 0
      %p68 = por %p66, %p67
      %s70 = sadd.s32 %s69, 1
      %p73 = scmp.eq.s32.totalorder %s14, 1
      %p74 = scmp.ne.s32.totalorder %s69, %s71
      %p75 = scmp.eq.s32.totalorder %s14, 0
      %p76 = por %p74, %p75
      %p77 = scmp.ne.s32.totalorder %s69, %s71
      %p78 = scmp.eq.s32.totalorder %s19, 1
      %p79 = por %p77, %p78
      %p80 = scmp.ne.s32.totalorder %s71, %s72
      %p81 = scmp.eq.s32.totalorder %s19, 0
      %p82 = por %p80, %p81
      %p83 = scmp.ne.s32.totalorder %s71, %s72
      %p84 = scmp.eq.s32.totalorder %s20, 1
      %p85 = por %p83, %p84
      %p87 = scmp.ne.s32.totalorder %s72, %s86
      %p88 = scmp.eq.s32.totalorder %s20, 0
      %p89 = por %p87, %p88
      %s91 = sadd.s32 %s90, 1
      %p94 = scmp.eq.s32.totalorder %s14, 1
      %p95 = scmp.ne.s32.totalorder %s90, %s92
      %p96 = scmp.eq.s32.totalorder %s14, 0
      %p97 = por %p95, %p96
      %p98 = scmp.ne.s32.totalorder %s90, %s92
      %p99 = scmp.eq.s32.totalorder %s19, 1
      %p100 = por %p98, %p99
      %p101 = scmp.ne.s32.totalorder %s92, %s93
      %p102 = scmp.eq.s32.totalorder %s19, 0
      %p103 = por %p101, %p102
      %p104 = scmp.ne.s32.totalorder %s92, %s93
      %p105 = scmp.eq.s32.totalorder %s20, 1
      %p106 = por %p104, %p105
      %p108 = scmp.ne.s32.totalorder %s93, %s107
      %p109 = scmp.eq.s32.totalorder %s20, 0
      %p110 = por %p108, %p109
      %s112 = sadd.s32 %s111, 1
      %p115 = scmp.eq.s32.totalorder %s14, 1
      %p116 = scmp.ne.s32.totalorder %s111, %s113
      %p117 = scmp.eq.s32.totalorder %s14, 0
      %p118 = por %p116, %p117
      %p119 = scmp.ne.s32.totalorder %s111, %s113
      %p120 = scmp.eq.s32.totalorder %s19, 1
      %p121 = por %p119, %p120
      %p122 = scmp.ne.s32.totalorder %s113, %s114
      %p123 = scmp.eq.s32.totalorder %s19, 0
      %p124 = por %p122, %p123
      %p125 = scmp.ne.s32.totalorder %s113, %s114
      %p126 = scmp.eq.s32.totalorder %s20, 1
      %p127 = por %p125, %p126
      %p129 = scmp.ne.s32.totalorder %s114, %s128
      %p130 = scmp.eq.s32.totalorder %s20, 0
      %p131 = por %p129, %p130
      %s132 = ssub.s32 %s14, %s21
      %p133 = scmp.eq.s32.totalorder %s132, 0
      %s135 = sadd.s32 %s134, 1
      %s136 = scalar_select %p133, %s134, %s135
      %p139 = pneg %p133
      %p140 = scmp.eq.s32.totalorder %s14, 1
      %p141 = por %p139, %p140
      %p142 = scmp.ne.s32.totalorder %s134, %s137
      %p143 = scmp.eq.s32.totalorder %s14, 0
      %p144 = por %p142, %p143
      %p145 = scmp.ne.s32.totalorder %s134, %s137
      %p146 = scmp.eq.s32.totalorder %s19, 1
      %p147 = por %p145, %p146
      %p148 = scmp.ne.s32.totalorder %s137, %s138
      %p149 = scmp.eq.s32.totalorder %s19, 0
      %p150 = por %p148, %p149
      %p151 = scmp.ne.s32.totalorder %s137, %s138
      %p152 = scmp.eq.s32.totalorder %s20, 1
      %p153 = por %p151, %p152
      %p155 = scmp.ne.s32.totalorder %s138, %s154
      %p156 = scmp.eq.s32.totalorder %s20, 0
      %p157 = por %p155, %p156
      %p158 = scmp.le.s32.totalorder 1, %s14
      %p159 = scmp.lt.s32.totalorder %s14, 3
      %p160 = pnand %p158, %p159
      %p161 = pneg %p160
      // Predicated region
      $region9: #{run.3} parent=5 // pred_check
        _
      $region10: #{run.3} parent=5 // pred_check_branch
        %163 = sbr.rel (%p160) target = $region12
      $region11: #{run.3} parent=5 // pred_region
        %s164 = ssub.s32 %s14, 1
        // Predicated region
        $region13: #{run.3} parent=11 // pred_check
          %p165 = pneg %p61
        $region14: #{run.3} parent=11 // pred_check_branch
          %167 = sbr.rel (%p165) target = $region16
        $region15: #{run.3} parent=11 // pred_region
          _
        $region16: #{run.3} parent=11 // pred_fallthru
          _
        // Predicated region
        $region17: #{run.3} parent=11 // pred_check
          %p168 = pneg %p82
        $region18: #{run.3} parent=11 // pred_check_branch
          %170 = sbr.rel (%p168) target = $region20
        $region19: #{run.3} parent=11 // pred_region
          _
        $region20: #{run.3} parent=11 // pred_fallthru
          _
        // Predicated region
        $region21: #{run.3} parent=11 // pred_check
          %p171 = pneg %p103
        $region22: #{run.3} parent=11 // pred_check_branch
          %173 = sbr.rel (%p171) target = $region24
        $region23: #{run.3} parent=11 // pred_region
          _
        $region24: #{run.3} parent=11 // pred_fallthru
          _
        // Predicated region
        $region25: #{run.3} parent=11 // pred_check
          %p174 = pneg %p124
        $region26: #{run.3} parent=11 // pred_check_branch
          %176 = sbr.rel (%p174) target = $region28
        $region27: #{run.3} parent=11 // pred_region
          _
        $region28: #{run.3} parent=11 // pred_fallthru
          _
      $region12: #{run.3} parent=5 // pred_fallthru
        _
      %p177 = scmp.lt.s32.totalorder %s14, 2
      // Predicated region
      $region29: #{run.3} parent=5 // pred_check
        %p178 = pneg %p177
      $region30: #{run.3} parent=5 // pred_check_branch
        %180 = sbr.rel (%p178) target = $region32
      $region31: #{run.3} parent=5 // pred_region
        // Predicated region
        $region33: #{run.3} parent=31 // pred_check
          %p181 = pneg %p34
        $region34: #{run.3} parent=31 // pred_check_branch
          %183 = sbr.rel (%p181) target = $region36
        $region35: #{run.3} parent=31 // pred_region
          %p184 = scmp.lt.s32.totalorder %s14, 1
          %s185 = scalar_select %p184, %s14, 1
          %s186 = smul.addr %s185, 2
          %s187 = smul.addr %s186, 8
          %s188 = scalar_lea.vmem %s0, %s187
        $region36: #{run.3} parent=31 // pred_fallthru
          _
      $region32: #{run.3} parent=5 // pred_fallthru
        _
      %p189 = scmp.le.s32.totalorder 1, %s14
      %p190 = scmp.lt.s32.totalorder %s14, 3
      %p191 = pnand %p189, %p190
      %p192 = pneg %p191
      // Predicated region
      $region37: #{run.3} parent=5 // pred_check
        _
      $region38: #{run.3} parent=5 // pred_check_branch
        %194 = sbr.rel (%p191) target = $region40
      $region39: #{run.3} parent=5 // pred_region
        %s195 = ssub.s32 %s14, 1
        %p196 = scmp.lt.s32.totalorder %s19, 1
        %s197 = scalar_select %p196, %s19, 1
        %s198 = smul.addr %s197, 2
        %s199 = smul.addr %s198, 8
        %s200 = scalar_lea.vmem %s0, %s199
        %p201 = pneg %p40
        %p202 = pneg %p37
        %p203 = pneg %p61
        %p204 = pneg %p58
        %p205 = pneg %p82
        %p206 = pneg %p79
        %p207 = pneg %p103
        %p208 = pneg %p100
        %p209 = pneg %p124
        %p210 = pneg %p121
        %p211 = pneg %p150
        %p212 = pneg %p147
        %s213 = sand.u32 %s137, 1
        %s214 = scalar_lea.sflag [#allocation3], %s213
        %s215 = sand.u32 %s137, 1
        %s216 = smul.addr %s215, 8
        %s217 = scalar_lea.vmem [#allocation2], %s216
        %p218 = scmp.lt.s32.totalorder %s19, 1
        %s219 = scalar_select %p218, %s19, 1
        %s220 = smul.addr %s219, 2
        %s221 = smul.addr %s220, 8
        %s222 = scalar_lea.vmem %s0, %s221
        %v224 = vld [vmem:[%s222] sm:$0xff]
        %v225 = vld [vmem:[%s222 + $0x8] sm:$0xff]
        %v226 = vpack.c.bf16 %v224, %v224
        %v227 = vpack.c.bf16 %v225, %v225
        %v228 = vld [vmem:[%s1] sm:$0xf]
        %v229 = vld [vmem:[%s1 + $0x4] sm:$0xf]
        %v230 = vld [vmem:[%s1 + $0x8] sm:$0xf]
        %v231 = vld [vmem:[%s1 + $0xc] sm:$0xf]
        %v232 = vld [vmem:[%s1 + $0x10] sm:$0xf]
        %v233 = vld [vmem:[%s1 + $0x14] sm:$0xf]
        %v234 = vld [vmem:[%s1 + $0x18] sm:$0xf]
        %v235 = vld [vmem:[%s1 + $0x1c] sm:$0xf]
        %v236 = vld [vmem:[%s1 + $0x20] sm:$0xf]
        %v237 = vld [vmem:[%s1 + $0x24] sm:$0xf]
        %v238 = vld [vmem:[%s1 + $0x28] sm:$0xf]
        %v239 = vld [vmem:[%s1 + $0x2c] sm:$0xf]
        %v240 = vld [vmem:[%s1 + $0x30] sm:$0xf]
        %v241 = vld [vmem:[%s1 + $0x34] sm:$0xf]
        %v242 = vld [vmem:[%s1 + $0x38] sm:$0xf]
        %v243 = vld [vmem:[%s1 + $0x3c] sm:$0xf]
        %v244 = vld [vmem:[%s1 + $0x40] sm:$0xf]
        %v245 = vld [vmem:[%s1 + $0x44] sm:$0xf]
        %v246 = vld [vmem:[%s1 + $0x48] sm:$0xf]
        %v247 = vld [vmem:[%s1 + $0x4c] sm:$0xf]
        %v248 = vld [vmem:[%s1 + $0x50] sm:$0xf]
        %v249 = vld [vmem:[%s1 + $0x54] sm:$0xf]
        %v250 = vld [vmem:[%s1 + $0x58] sm:$0xf]
        %v251 = vld [vmem:[%s1 + $0x5c] sm:$0xf]
        %v252 = vld [vmem:[%s2] sm:$0x1]
        %v254 = vlaneseq
        %v255 = vshrl.u32 %v254, 7
        %v256 = vsub.s32 0, %v255
        %v257 = vrot.slane %v252, %v256
        %v283 = vunpack.c.l.b16 %v228
        %v284 = vunpack.c.l.b16 %v229
        %v285 = vunpack.c.l.b16 %v230
        %v286 = vunpack.c.l.b16 %v231
        %v287 = vunpack.c.l.b16 %v232
        %v288 = vunpack.c.l.b16 %v233
        %v289 = vunpack.c.l.b16 %v234
        %v290 = vunpack.c.l.b16 %v235
        %v291 = vunpack.c.l.b16 %v236
        %v292 = vunpack.c.l.b16 %v237
        %v293 = vunpack.c.l.b16 %v238
        %v294 = vunpack.c.l.b16 %v239
        %v295 = vunpack.c.l.b16 %v240
        %v296 = vunpack.c.l.b16 %v241
        %v297 = vunpack.c.l.b16 %v242
        %v298 = vunpack.c.l.b16 %v243
        %v299 = vunpack.c.l.b16 %v244
        %v300 = vunpack.c.l.b16 %v245
        %v301 = vunpack.c.l.b16 %v246
        %v302 = vunpack.c.l.b16 %v247
        %v303 = vunpack.c.l.b16 %v248
        %v304 = vunpack.c.l.b16 %v249
        %v305 = vunpack.c.l.b16 %v250
        %v306 = vunpack.c.l.b16 %v251
        %v307 = vpack.c.b16 %v284, %v283
        %v308 = vpack.c.b16 %v286, %v285
        %v309 = vpack.c.b16 %v288, %v287
        %v310 = vpack.c.b16 %v290, %v289
        %v311 = vpack.c.b16 %v292, %v291
        %v312 = vpack.c.b16 %v294, %v293
        %v313 = vpack.c.b16 %v296, %v295
        %v314 = vpack.c.b16 %v298, %v297
        %v315 = vpack.c.b16 %v300, %v299
        %v316 = vpack.c.b16 %v302, %v301
        %v317 = vpack.c.b16 %v304, %v303
        %v318 = vpack.c.b16 %v306, %v305
        %vm331 = vcmask 523264
        %v333 = vsel %vm331, %v227, 0
        %335 = vmatprep.subr.bf16.mxu0 0
        %336 = vmatpush1.bf16.msra.mxu0 %v307
        %337 = vmatprep.subr.bf16.mxu0 0
        %338 = vmatpush1.bf16.msra.mxu0 %v308
        %339 = vmatprep.subr.bf16.mxu0 0
        %340 = vmatpush1.bf16.msra.mxu0 %v309
        %341 = vmatprep.subr.bf16.mxu0 0
        %342 = vmatpush1.bf16.msra.mxu0 %v310
        %343 = vmatprep.subr.bf16.mxu0 0
        %344 = vmatpush1.bf16.msra.mxu0 %v311
        %345 = vmatprep.subr.bf16.mxu0 0
        %346 = vmatpush1.bf16.msra.mxu0 %v312
        %347 = vmatprep.subr.bf16.mxu0 0
        %348 = vmatpush1.bf16.msra.mxu0 %v313
        %349 = vmatprep.subr.bf16.mxu0 0
        %350 = vmatpush1.bf16.msra.mxu0 %v314
        %351 = vmatprep.subr.bf16.mxu0 0
        %352 = vmatpush1.bf16.msra.mxu0 %v315
        %353 = vmatprep.subr.bf16.mxu0 0
        %354 = vmatpush1.bf16.msra.mxu0 %v316
        %355 = vmatprep.subr.bf16.mxu0 0
        %356 = vmatpush1.bf16.msra.mxu0 %v317
        %357 = vmatprep.subr.bf16.mxu0 0
        %358 = vmatpush1.bf16.msra.mxu0 %v318
        %359 = vmatprep.subr.bf16.mxu0 0
        %360 = vmatpush1.bf16.msra.mxu0 0
        %361 = vmatprep.subr.bf16.mxu0 0
        %362 = vmatpush1.bf16.msra.mxu0 0
        %363 = vmatprep.subr.bf16.mxu0 0
        %364 = vmatpush1.bf16.msra.mxu0 0
        %365 = vmatprep.subr.bf16.mxu0 0
        %366 = vmatpush1.bf16.msra.mxu0 0
        %367 = vmatprep.mubr.bf16.mxu0 %v333
        %368 = vmatmul.mubr.bf16.gmra.mrb[0].mxu0 %v226
        %v369 = vpop.f32.mrb[0].mxu0
        %v370 = vadd.f32 %v257, %v369
        %v371 = vpop.f32.mrb[0].mxu0
        %v372 = vpop.f32.mrb[0].mxu0
        %v373 = vpop.f32.mrb[0].mxu0
        %374 = vdwg.mxu0
        %v375 = vmul.f32 %v370, %v370
        %v376 = vmul.f32 %v370, %v375
        %v377 = vmul.f32 %v376, 0.044715
        %v378 = vadd.f32 %v370, %v377
        %v379 = vmul.f32 %v378, 0.7978846
        %v380 = vtanh.pop %v379
        %v381 = vadd.f32 %v380, 1.0
        %v382 = vmul.f32 %v381, 0.5
        %v383 = vmul.f32 %v370, %v382
        %v384 = vpack.c.bf16 %v383, %v383
        %v385 = vld [vmem:[%s3] sm:$0xf]
        %v386 = vld [vmem:[%s3 + $0x4] sm:$0xf]
        %v387 = vld [vmem:[%s3 + $0x8] sm:$0xf]
        %v388 = vld [vmem:[%s3 + $0xc] sm:$0xf]
        %v389 = vld [vmem:[%s3 + $0x10] sm:$0xf]
        %v390 = vld [vmem:[%s3 + $0x14] sm:$0xf]
        %v391 = vld [vmem:[%s3 + $0x18] sm:$0xf]
        %v392 = vld [vmem:[%s3 + $0x1c] sm:$0xf]
        %v393 = vld [vmem:[%s3 + $0x20] sm:$0xf]
        %v394 = vld [vmem:[%s3 + $0x24] sm:$0xf]
        %v395 = vld [vmem:[%s3 + $0x28] sm:$0xf]
        %v396 = vld [vmem:[%s3 + $0x2c] sm:$0xf]
        %v397 = vld [vmem:[%s3 + $0x30] sm:$0xf]
        %v398 = vld [vmem:[%s3 + $0x34] sm:$0xf]
        %v399 = vld [vmem:[%s3 + $0x38] sm:$0xf]
        %v400 = vld [vmem:[%s3 + $0x3c] sm:$0xf]
        %v401 = vld [vmem:[%s4] sm:$0x1]
        %v403 = vlaneseq
        %v404 = vshrl.u32 %v403, 7
        %v405 = vsub.s32 0, %v404
        %v406 = vrot.slane %v401, %v405
        %v424 = vunpack.c.l.b16 %v385
        %v425 = vunpack.c.l.b16 %v386
        %v426 = vunpack.c.l.b16 %v387
        %v427 = vunpack.c.l.b16 %v388
        %v428 = vunpack.c.l.b16 %v389
        %v429 = vunpack.c.l.b16 %v390
        %v430 = vunpack.c.l.b16 %v391
        %v431 = vunpack.c.l.b16 %v392
        %v432 = vunpack.c.l.b16 %v393
        %v433 = vunpack.c.l.b16 %v394
        %v434 = vunpack.c.l.b16 %v395
        %v435 = vunpack.c.l.b16 %v396
        %v436 = vunpack.c.l.b16 %v397
        %v437 = vunpack.c.l.b16 %v398
        %v438 = vunpack.c.l.b16 %v399
        %v439 = vunpack.c.l.b16 %v400
        %v440 = vpack.c.b16 %v425, %v424
        %v441 = vpack.c.b16 %v427, %v426
        %v442 = vpack.c.b16 %v429, %v428
        %v443 = vpack.c.b16 %v431, %v430
        %v444 = vpack.c.b16 %v433, %v432
        %v445 = vpack.c.b16 %v435, %v434
        %v446 = vpack.c.b16 %v437, %v436
        %v447 = vpack.c.b16 %v439, %v438
        %456 = vmatprep.subr.bf16.mxu0 0
        %457 = vmatpush1.bf16.msra.mxu0 %v440
        %458 = vmatprep.subr.bf16.mxu0 0
        %459 = vmatpush1.bf16.msra.mxu0 %v441
        %460 = vmatprep.subr.bf16.mxu0 0
        %461 = vmatpush1.bf16.msra.mxu0 %v442
        %462 = vmatprep.subr.bf16.mxu0 0
        %463 = vmatpush1.bf16.msra.mxu0 %v443
        %464 = vmatprep.subr.bf16.mxu0 0
        %465 = vmatpush1.bf16.msra.mxu0 %v444
        %466 = vmatprep.subr.bf16.mxu0 0
        %467 = vmatpush1.bf16.msra.mxu0 %v445
        %468 = vmatprep.subr.bf16.mxu0 0
        %469 = vmatpush1.bf16.msra.mxu0 %v446
        %470 = vmatprep.subr.bf16.mxu0 0
        %471 = vmatpush1.bf16.msra.mxu0 %v447
        %472 = vmatprep.subr.bf16.mxu0 0
        %473 = vmatpush1.bf16.msra.mxu0 0
        %474 = vmatprep.subr.bf16.mxu0 0
        %475 = vmatpush1.bf16.msra.mxu0 0
        %476 = vmatprep.subr.bf16.mxu0 0
        %477 = vmatpush1.bf16.msra.mxu0 0
        %478 = vmatprep.subr.bf16.mxu0 0
        %479 = vmatpush1.bf16.msra.mxu0 0
        %480 = vmatprep.subr.bf16.mxu0 0
        %481 = vmatpush1.bf16.msra.mxu0 0
        %482 = vmatprep.subr.bf16.mxu0 0
        %483 = vmatpush1.bf16.msra.mxu0 0
        %484 = vmatprep.subr.bf16.mxu0 0
        %485 = vmatpush1.bf16.msra.mxu0 0
        %486 = vmatprep.subr.bf16.mxu0 0
        %487 = vmatpush1.bf16.msra.mxu0 0
        %488 = vmatprep.mubr.bf16.mxu0 0
        %489 = vmatmul.mubr.bf16.gmra.mrb[0].mxu0 %v384
        %v490 = vpop.f32.mrb[0].mxu0
        %v491 = vadd.f32 %v406, %v490
        %v492 = vpop.f32.mrb[0].mxu0
        %v493 = vpop.f32.mrb[0].mxu0
        %v494 = vpop.f32.mrb[0].mxu0
        %495 = vdwg.mxu0
        %496 = vst [vmem:[%s217] sm:$0xff] %v491
        %s497 = sand.u32 %s137, 1
        %s498 = scalar_lea.sflag [#allocation3], %s497
        %s499 = sand.u32 %s137, 1
        %s500 = smul.addr %s499, 8
        %s501 = scalar_lea.vmem [#allocation2], %s500
        // Predicated region
        $region41: #{run.3} parent=39 // pred_check
          %p502 = pneg %p147
        $region42: #{run.3} parent=39 // pred_check_branch
          %504 = sbr.rel (%p502) target = $region44
        $region43: #{run.3} parent=39 // pred_region
          %s506 = ssub.s32 128, 128
          %507 = vsyncadd %s498, %s506
          %s508 = smul.addr %s19, 128
          %s509 = scalar_lea.hbm %s5, %s508
          %s511 = sshll.u32 %s501, 4
          %s512 = int_to_ptr.vmem [resolvable:$true] %s511
          %514 = dma.vmem_to_hbm [thread:$0]  %s512, 128, %s509, %s498
        $region44: #{run.3} parent=39 // pred_fallthru
          _
      $region40: #{run.3} parent=5 // pred_fallthru
        _
      %p515 = scmp.le.s32.totalorder 2, %s14
      // Predicated region
      $region45: #{run.3} parent=5 // pred_check
        %p516 = pneg %p515
      $region46: #{run.3} parent=5 // pred_check_branch
        %518 = sbr.rel (%p516) target = $region48
      $region47: #{run.3} parent=5 // pred_region
        %s519 = ssub.s32 %s14, 2
        // Predicated region
        $region49: #{run.3} parent=47 // pred_check
          %p520 = pneg %p153
        $region50: #{run.3} parent=47 // pred_check_branch
          %522 = sbr.rel (%p520) target = $region52
        $region51: #{run.3} parent=47 // pred_region
          %s523 = sand.u32 %s138, 1
          %s524 = scalar_lea.sflag [#allocation3], %s523
          %s525 = sand.u32 %s138, 1
          %s526 = smul.addr %s525, 8
          %s527 = scalar_lea.vmem [#allocation2], %s526
          %528 = dma.done %s524, 128
        $region52: #{run.3} parent=47 // pred_fallthru
          _
      $region48: #{run.3} parent=5 // pred_fallthru
        _
    $region6: #{run.3} parent=1 // loop_footer
      %s18 = sadd.s32 1, %s14
    $region7: #{run.3} parent=1 // loop_footer_branch
      %13 = sbr.rel target = $region3
    $region8: #{run.3} parent=1 // loop_exit
      _
    %529 = vsyncpa [#allocation3], 1
    %s530 = scalar_lea.sflag [#allocation3], 1
    %531 = vsyncpa %s530, 1

</llo_original>
